<compile_context>
chip_gen: v7x
topology: tpu7x:2x2x1
jax: 0.10.0
libtpu: 0.0.40
codegen_flags: <defaults>
</compile_context>

<pallas_src>
import functools

import jax
import jax.numpy as jnp
from jax import lax
from jax.experimental import pallas as pl
from jax.experimental.pallas import tpu as pltpu


def _round_up(x, m):
    return ((x + m - 1) // m) * m


def _round_down(x, m):
    return (x // m) * m


def _focal_loss_kernel(*refs, gamma, l_valid, sb, has_alpha):
    if has_alpha:
        x_ref, t_ref, a_ref, out_ref, acc_ref = refs
    else:
        x_ref, t_ref, out_ref, acc_ref = refs
        a_ref = None

    j = pl.program_id(1)

    @pl.when(j == 0)
    def _():
        acc_ref[...] = jnp.zeros_like(acc_ref)

    x = x_ref[...].astype(jnp.float32)            # (C, SB, 128)
    t = t_ref[...]                                # (SB, 128) int32
    C = x.shape[0]

    # --- softmax statistics over the leading class axis (plain VPU ops) ---
    m = jnp.max(x, axis=0)                        # (SB, 128)
    e = jnp.exp(x - m[None])                      # (C, SB, 128)
    sumexp = jnp.sum(e, axis=0)                   # (SB, 128)

    # --- gather x_t / e_t (and alpha_t) via one-hot select, no dynamic gather ---
    cls = lax.broadcasted_iota(jnp.int32, x.shape, 0)
    onehot = cls == t[None]                       # (C, SB, 128)
    x_t = jnp.sum(jnp.where(onehot, x, 0.0), axis=0)   # (SB, 128)
    e_t = jnp.sum(jnp.where(onehot, e, 0.0), axis=0)   # (SB, 128)

    logpt = x_t - m - jnp.log(sumexp)                       # (SB, 128)
    pt = e_t * pl.reciprocal(sumexp, approx=True)           # (SB, 128), EUP slot
    one_minus_pt = 1.0 - pt

    # (1 - pt)**gamma specialized for small static integer gamma (gamma=0 -> 1).
    gi = int(gamma)
    if float(gamma) == float(gi) and 0 <= gi <= 8:
        factor = jnp.ones_like(pt)
        for _ in range(gi):
            factor = factor * one_minus_pt
    else:
        factor = jnp.power(jnp.maximum(one_minus_pt, 0.0), jnp.float32(gamma))

    if has_alpha:
        # Hoisted single broadcast of the (C,1,1) class weights to the tile shape.
        a = jnp.broadcast_to(a_ref[...].astype(jnp.float32), x.shape)
        at = jnp.sum(jnp.where(onehot, a, 0.0), axis=0)     # (SB, 128)
        logpt = logpt * at

    loss = -1.0 * factor * logpt                            # (SB, 128)

    # --- mask pixels beyond the true spatial extent (row/lane padding, edge blocks) ---
    row = j * sb + lax.broadcasted_iota(jnp.int32, t.shape, 0)
    lane = lax.broadcasted_iota(jnp.int32, t.shape, 1)
    valid = (row * 128 + lane) < l_valid
    acc_ref[...] += jnp.where(valid, loss, 0.0)

    @pl.when(j == pl.num_programs(1) - 1)
    def _():
        # Fold (SB,128) -> (8,128) with vreg-aligned adds; final reduce in wrapper.
        out_ref[...] = jnp.sum(acc_ref[...].reshape(sb // 8, 8, 128), axis=0)


def focal_loss(logits, target, gamma=0.0, alpha=None, size_average=True,
               block_bytes=2 * 1024 * 1024):
    """Pallas FocalLoss forward.

    logits: (N, C) or (N, C, H, W) float array (PyTorch NCHW convention).
    target: (N,) or (N, H, W) integer class indices.
    alpha : None, float (C must be 2), or per-class weight list.
    """
    x = jnp.asarray(logits)
    if x.ndim > 2:
        N, C = int(x.shape[0]), int(x.shape[1])
        x = x.reshape(N, C, -1)                     # (N, C, L)  -- no copy
        L = int(x.shape[2])
    else:
        C = int(x.shape[1])
        N = 1
        x = jnp.transpose(x, (1, 0))[None]          # (1, C, M)  -- tiny 2-D case only
        L = int(x.shape[2])
    t = jnp.asarray(target).reshape(N, L).astype(jnp.int32)
    M_total = N * L

    # ---- alpha setup (mirrors the module __init__) ----
    has_alpha = alpha is not None
    alpha_arr = None
    if has_alpha:
        if isinstance(alpha, (float, int)):
            # PyTorch builds a 2-entry [alpha, 1-alpha] table -> only valid for C == 2.
            if C != 2:
                raise ValueError("scalar alpha requires C == 2 (as in the PyTorch module)")
            alpha_vec = jnp.array([float(alpha), 1.0 - float(alpha)], dtype=jnp.float32)
        else:
            alpha_vec = jnp.asarray(alpha, dtype=jnp.float32).reshape(-1)
            if int(alpha_vec.shape[0]) != C:
                raise ValueError("alpha must provide one weight per class")
        alpha_arr = alpha_vec.reshape(C, 1, 1)

    # ---- pixel axis -> full (sublane, lane) tiles: (N, C, R, 128) ----
    L_pad = max(_round_up(L, 128), 8 * 128)   # at least 8 rows of 128 lanes
    if L_pad != L:
        # TODO(synk): avoid this full-copy pad when L % 128 != 0 by keeping a flat
        # lane-layout fallback; typical segmentation shapes (H*W % 1024 == 0) are copy-free.
        x = jnp.pad(x, ((0, 0), (0, 0), (0, L_pad - L)))
        t = jnp.pad(t, ((0, 0), (0, L_pad - L)))
    R = L_pad // 128
    x = x.reshape(N, C, R, 128)                 # metadata-only reshape
    t = t.reshape(N, R, 128)

    # ---- bytes-based block sizing: ~block_bytes of logits per block ----
    itemsize = jnp.dtype(x.dtype).itemsize
    rows_target = max(8, _round_down(block_bytes // max(1, C * 128 * itemsize), 8))
    sb = min(rows_target, _round_down(R, 8))    # multiple of 8, <= R
    grid = (N, pl.cdiv(R, sb))

    kernel = functools.partial(_focal_loss_kernel, gamma=float(gamma),
                               l_valid=L, sb=sb, has_alpha=has_alpha)

    in_specs = [
        pl.BlockSpec((None, C, sb, 128), lambda b, j: (b, 0, j, 0)),   # logits
        pl.BlockSpec((None, sb, 128), lambda b, j: (b, j, 0)),         # targets
    ]
    args = [x, t]
    if has_alpha:
        in_specs.append(pl.BlockSpec((C, 1, 1), lambda b, j: (0, 0, 0)))
        args.append(alpha_arr)
    # TODO(synk): for bf16 logits + small C, stream targets as int16 to cut HBM bytes.
    # TODO(synk): tile the class axis (two-pass softmax) for very large C.

    partials = pl.pallas_call(
        kernel,
        out_shape=jax.ShapeDtypeStruct((N, 8, 128), jnp.float32),
        grid_spec=pltpu.PrefetchScalarGridSpec(
            num_scalar_prefetch=0,
            grid=grid,
            in_specs=in_specs,
            out_specs=pl.BlockSpec((None, 8, 128), lambda b, j: (b, 0, 0)),
            scratch_shapes=[pltpu.VMEM((sb, 128), jnp.float32)],
        ),
        compiler_params=pltpu.CompilerParams(
            # batch axis independent (both TCs on v7x); pixel-tile axis is the
            # sequential reduction into the per-batch accumulator.
            dimension_semantics=("parallel", "arbitrary"),
            vmem_limit_bytes=32 * 1024 * 1024),
    )(*args)   # logits passed in native dtype (no f32 up-cast in HBM)

    total = jnp.sum(partials)
    if size_average:
        return total / jnp.float32(M_total)
    return total


def _focal_loss_ref(logits, target, gamma=0.0, alpha=None, size_average=True):
    """Pure-JAX reference mirroring the PyTorch forward."""
    x = jnp.asarray(logits)
    if x.ndim > 2:
        N, C = x.shape[0], x.shape[1]
        x = x.reshape(N, C, -1).transpose(0, 2, 1).reshape(-1, C)
    C = x.shape[1]
    t = jnp.asarray(target).reshape(-1)
    logp = jax.nn.log_softmax(x.astype(jnp.float32), axis=1)
    logpt = jnp.take_along_axis(logp, t[:, None], axis=1)[:, 0]
    pt = jnp.exp(logpt)
    if alpha is not None:
        if isinstance(alpha, (float, int)):
            a = jnp.array([alpha, 1.0 - alpha], dtype=jnp.float32)
        else:
            a = jnp.asarray(alpha, dtype=jnp.float32)
        logpt = logpt * a[t]
    loss = -1.0 * (1.0 - pt) ** gamma * logpt
    return loss.mean() if size_average else loss.sum()


if __name__ == "__main__":
    key = jax.random.PRNGKey(0)
    k1, k2 = jax.random.split(key)

    N, C, H, W = 2, 4, 16, 16
    x = jax.random.normal(k1, (N, C, H, W), dtype=jnp.float32)
    tgt = jax.random.randint(k2, (N, H, W), 0, C, dtype=jnp.int32)

    # alpha-weighted, gamma=2 path
    gamma = 2.0
    alpha = [0.25, 0.25, 0.25, 0.25]
    out = focal_loss(x, tgt, gamma=gamma, alpha=alpha, size_average=True)
    out = jax.block_until_ready(out)
    ref = _focal_loss_ref(x, tgt, gamma=gamma, alpha=alpha, size_average=True)
    assert jnp.allclose(out, ref, rtol=2e-3, atol=1e-6), (out, ref)

    # no-alpha fast path (statically specialized), sum reduction
    out2 = focal_loss(x, tgt, gamma=0.0, alpha=None, size_average=False)
    out2 = jax.block_until_ready(out2)
    ref2 = _focal_loss_ref(x, tgt, gamma=0.0, alpha=None, size_average=False)
    assert jnp.allclose(out2, ref2, rtol=2e-3, atol=1e-5), (out2, ref2)

    print("KERNEL_OK")
</pallas_src>

<mosaic_0001>
module attributes {stable_mosaic.version = 11 : i64} {
  func.func @_focal_loss_kernel(%arg0: i32, %arg1: i32, %arg2: memref<1x4x8x128xf32, #tpu.memory_space<vmem>>, %arg3: memref<1x8x128xi32, #tpu.memory_space<vmem>>, %arg4: memref<4x1x1xf32, #tpu.memory_space<vmem>>, %arg5: memref<1x8x128xf32, #tpu.memory_space<vmem>>, %arg6: memref<8x128xf32, #tpu.memory_space<vmem>>) attributes {dimension_semantics = [#tpu.dimension_semantics<parallel>, #tpu.dimension_semantics<arbitrary>], iteration_bounds = array<i64: 2, 1>, scalar_prefetch = 0 : i64, scratch_operands = 1 : i64, tpu.core_type = #tpu.core_type<tc>, window_params = [{transform_indices = @transform_0, window_bounds = array<i64: 1, 4, 8, 128>}, {transform_indices = @transform_1, window_bounds = array<i64: 1, 8, 128>}, {pipeline_mode = #tpu.pipeline_mode<synchronous>, transform_indices = @transform_2, window_bounds = array<i64: 4, 1, 1>}, {transform_indices = @transform_3, window_bounds = array<i64: 1, 8, 128>}]} {
    %c0_i32 = arith.constant 0 : i32
    %0 = arith.cmpi eq, %arg1, %c0_i32 : i32
    %1 = arith.extui %0 : i1 to i32
    %c0_i32_0 = arith.constant 0 : i32
    %2 = arith.cmpi ne, %1, %c0_i32_0 : i32
    scf.if %2 {
      %cst_27 = arith.constant 0.000000e+00 : f32
      %61 = vector.broadcast %cst_27 : f32 to vector<8x128xf32>
      %c0_28 = arith.constant 0 : index
      %c0_29 = arith.constant 0 : index
      %62 = vector.load %arg6[%c0_28, %c0_29] : memref<8x128xf32, #tpu.memory_space<vmem>>, vector<8x128xf32>
      tpu.vector_store %arg6[%c0_28, %c0_29], %61 {strides = array<i32>} : memref<8x128xf32, #tpu.memory_space<vmem>>, vector<8x128xf32>,
    } else {
    }
    %c0 = arith.constant 0 : index
    %c0_1 = arith.constant 0 : index
    %c0_2 = arith.constant 0 : index
    %c0_3 = arith.constant 0 : index
    %3 = vector.load %arg2[%c0, %c0_1, %c0_2, %c0_3] : memref<1x4x8x128xf32, #tpu.memory_space<vmem>>, vector<1x4x8x128xf32>
    %4 = vector.shape_cast %3 : vector<1x4x8x128xf32> to vector<4x8x128xf32>
    %c0_4 = arith.constant 0 : index
    %c0_5 = arith.constant 0 : index
    %c0_6 = arith.constant 0 : index
    %5 = vector.load %arg3[%c0_4, %c0_5, %c0_6] : memref<1x8x128xi32, #tpu.memory_space<vmem>>, vector<1x8x128xi32>
    %6 = vector.shape_cast %5 : vector<1x8x128xi32> to vector<8x128xi32>
    %cst = arith.constant dense<0xFF800000> : vector<8x128xf32>
    %7 = vector.multi_reduction <maximumf>, %4, %cst [0] : vector<4x8x128xf32> to vector<8x128xf32>
    %8 = vector.shape_cast %7 : vector<8x128xf32> to vector<1x8x128xf32>
    %9 = vector.broadcast %8 : vector<1x8x128xf32> to vector<4x8x128xf32>
    %10 = arith.subf %4, %9 : vector<4x8x128xf32>
    %11 = math.exp %10 : vector<4x8x128xf32>
    %cst_7 = arith.constant dense<0.000000e+00> : vector<8x128xf32>
    %12 = vector.multi_reduction <add>, %11, %cst_7 [0] : vector<4x8x128xf32> to vector<8x128xf32>
    %13 = tpu.iota {dimensions = array<i32: 0>} : vector<4x8x128xi32>
    %14 = vector.shape_cast %6 : vector<8x128xi32> to vector<1x8x128xi32>
    %15 = vector.broadcast %14 : vector<1x8x128xi32> to vector<4x8x128xi32>
    %16 = arith.cmpi eq, %13, %15 : vector<4x8x128xi32>
    %cst_8 = arith.constant 0.000000e+00 : f32
    %17 = vector.broadcast %cst_8 : f32 to vector<4x8x128xf32>
    %18 = arith.select %16, %4, %17 : vector<4x8x128xi1>, vector<4x8x128xf32>
    %cst_9 = arith.constant dense<0.000000e+00> : vector<8x128xf32>
    %19 = vector.multi_reduction <add>, %18, %cst_9 [0] : vector<4x8x128xf32> to vector<8x128xf32>
    %cst_10 = arith.constant 0.000000e+00 : f32
    %20 = vector.broadcast %cst_10 : f32 to vector<4x8x128xf32>
    %21 = arith.select %16, %11, %20 : vector<4x8x128xi1>, vector<4x8x128xf32>
    %cst_11 = arith.constant dense<0.000000e+00> : vector<8x128xf32>
    %22 = vector.multi_reduction <add>, %21, %cst_11 [0] : vector<4x8x128xf32> to vector<8x128xf32>
    %23 = arith.subf %19, %7 : vector<8x128xf32>
    %24 = math.log %12 : vector<8x128xf32>
    %25 = arith.subf %23, %24 : vector<8x128xf32>
    %26 = tpu.reciprocal %12 {approx = true} : vector<8x128xf32> -> vector<8x128xf32>
    %27 = arith.mulf %22, %26 : vector<8x128xf32>
    %cst_12 = arith.constant 1.000000e+00 : f32
    %28 = vector.broadcast %cst_12 : f32 to vector<8x128xf32>
    %29 = arith.subf %28, %27 : vector<8x128xf32>
    %cst_13 = arith.constant 1.000000e+00 : f32
    %30 = vector.broadcast %cst_13 : f32 to vector<8x128xf32>
    %31 = arith.mulf %30, %29 : vector<8x128xf32>
    %32 = arith.mulf %31, %29 : vector<8x128xf32>
    %c0_14 = arith.constant 0 : index
    %c0_15 = arith.constant 0 : index
    %c0_16 = arith.constant 0 : index
    %33 = vector.load %arg4[%c0_14, %c0_15, %c0_16] : memref<4x1x1xf32, #tpu.memory_space<vmem>>, vector<4x1x1xf32>
    %34 = vector.shape_cast %33 : vector<4x1x1xf32> to vector<4x1x1xf32>
    %35 = vector.broadcast %34 : vector<4x1x1xf32> to vector<4x8x128xf32>
    %cst_17 = arith.constant 0.000000e+00 : f32
    %36 = vector.broadcast %cst_17 : f32 to vector<4x8x128xf32>
    %37 = arith.select %16, %35, %36 : vector<4x8x128xi1>, vector<4x8x128xf32>
    %cst_18 = arith.constant dense<0.000000e+00> : vector<8x128xf32>
    %38 = vector.multi_reduction <add>, %37, %cst_18 [0] : vector<4x8x128xf32> to vector<8x128xf32>
    %39 = arith.mulf %25, %38 : vector<8x128xf32>
    %cst_19 = arith.constant -1.000000e+00 : f32
    %40 = vector.broadcast %cst_19 : f32 to vector<8x128xf32>
    %41 = arith.mulf %40, %32 : vector<8x128xf32>
    %42 = arith.mulf %41, %39 : vector<8x128xf32>
    %c8_i32 = arith.constant 8 : i32
    %43 = arith.muli %arg1, %c8_i32 : i32
    %44 = tpu.iota {dimensions = array<i32: 0>} : vector<8x128xi32>
    %45 = vector.broadcast %43 : i32 to vector<8x128xi32>
    %46 = arith.addi %45, %44 : vector<8x128xi32>
    %47 = tpu.iota {dimensions = array<i32: 1>} : vector<8x128xi32>
    %c128_i32 = arith.constant 128 : i32
    %48 = vector.broadcast %c128_i32 : i32 to vector<8x128xi32>
    %49 = arith.muli %46, %48 : vector<8x128xi32>
    %50 = arith.addi %49, %47 : vector<8x128xi32>
    %c256_i32 = arith.constant 256 : i32
    %51 = vector.broadcast %c256_i32 : i32 to vector<8x128xi32>
    %52 = arith.cmpi slt, %50, %51 : vector<8x128xi32>
    %c0_20 = arith.constant 0 : index
    %c0_21 = arith.constant 0 : index
    %53 = vector.load %arg6[%c0_20, %c0_21] : memref<8x128xf32, #tpu.memory_space<vmem>>, vector<8x128xf32>
    %cst_22 = arith.constant 0.000000e+00 : f32
    %54 = vector.broadcast %cst_22 : f32 to vector<8x128xf32>
    %55 = arith.select %52, %42, %54 : vector<8x128xi1>, vector<8x128xf32>
    %56 = arith.addf %53, %55 : vector<8x128xf32>
    %c0_23 = arith.constant 0 : index
    %c0_24 = arith.constant 0 : index
    %57 = vector.load %arg6[%c0_23, %c0_24] : memref<8x128xf32, #tpu.memory_space<vmem>>, vector<8x128xf32>
    tpu.vector_store %arg6[%c0_23, %c0_24], %56 {strides = array<i32>} : memref<8x128xf32, #tpu.memory_space<vmem>>, vector<8x128xf32>,
    %c0_i32_25 = arith.constant 0 : i32
    %58 = arith.cmpi eq, %arg1, %c0_i32_25 : i32
    %59 = arith.extui %58 : i1 to i32
    %c0_i32_26 = arith.constant 0 : i32
    %60 = arith.cmpi ne, %59, %c0_i32_26 : i32
    scf.if %60 {
      %c0_27 = arith.constant 0 : index
      %c0_28 = arith.constant 0 : index
      %61 = vector.load %arg6[%c0_27, %c0_28] : memref<8x128xf32, #tpu.memory_space<vmem>>, vector<8x128xf32>
      %62 = vector.shape_cast %61 : vector<8x128xf32> to vector<1x8x128xf32>
      %cst_29 = arith.constant dense<0.000000e+00> : vector<8x128xf32>
      %63 = vector.multi_reduction <add>, %62, %cst_29 [0] : vector<1x8x128xf32> to vector<8x128xf32>
      %c0_30 = arith.constant 0 : index
      %c0_31 = arith.constant 0 : index
      %c0_32 = arith.constant 0 : index
      %64 = vector.load %arg5[%c0_30, %c0_31, %c0_32] : memref<1x8x128xf32, #tpu.memory_space<vmem>>, vector<1x8x128xf32>
      %65 = vector.shape_cast %64 : vector<1x8x128xf32> to vector<8x128xf32>
      %66 = vector.shape_cast %63 : vector<8x128xf32> to vector<1x8x128xf32>
      tpu.vector_store %arg5[%c0_30, %c0_31, %c0_32], %66 {strides = array<i32>} : memref<1x8x128xf32, #tpu.memory_space<vmem>>, vector<1x8x128xf32>,
    } else {
    }
    return
  }
  func.func @transform_0(%arg0: i32, %arg1: i32) -> (i32, i32, i32, i32) {
    %c0_i32 = arith.constant 0 : i32
    %c0_i32_0 = arith.constant 0 : i32
    %c0_i32_1 = arith.constant 0 : i32
    return %arg0, %c0_i32, %arg1, %c0_i32_0 : i32, i32, i32, i32
  }
  func.func @transform_1(%arg0: i32, %arg1: i32) -> (i32, i32, i32) {
    %c0_i32 = arith.constant 0 : i32
    %c0_i32_0 = arith.constant 0 : i32
    return %arg0, %arg1, %c0_i32 : i32, i32, i32
  }
  func.func @transform_2(%arg0: i32, %arg1: i32) -> (i32, i32, i32) {
    %c0_i32 = arith.constant 0 : i32
    %c0_i32_0 = arith.constant 0 : i32
    %c0_i32_1 = arith.constant 0 : i32
    %c0_i32_2 = arith.constant 0 : i32
    return %c0_i32, %c0_i32_0, %c0_i32_1 : i32, i32, i32
  }
  func.func @transform_3(%arg0: i32, %arg1: i32) -> (i32, i32, i32) {
    %c0_i32 = arith.constant 0 : i32
    %c0_i32_0 = arith.constant 0 : i32
    %c0_i32_1 = arith.constant 0 : i32
    return %arg0, %c0_i32, %c0_i32_0 : i32, i32, i32
  }
}

</mosaic_0001>

<llo_original>
// kernel: tpu_custom_call.1
$region0: #{tpu_custom_call.1}
  #allocation0 [shape = 'u32[]', space=smem, size = 0x4, offset = 0x4, fixed_abs, tag = 'smem constant byte address 0x4 - core index']
  #allocation1 [shape = 'u32[144,128]{1,0:T(1,128)}', space=vmem, size = 0x12000, scoped, tag = 'internal scratch']
  #allocation2 [shape = 'f32[8,128]{1,0:T(8,128)}', space=vmem, size = 0x1000, scoped, tag = 'scratch operand']
  %s0 = inlined_call_operand.hbm [shape: f32[2,4,8,128], index: 0, kind: input, shape index: {}]
  %s1 = inlined_call_operand.hbm [shape: s32[2,8,128], index: 1, kind: input, shape index: {}]
  %s2 = inlined_call_operand.vmem [shape: f32[4,1,1], index: 2, kind: input, shape index: {}]
  %s3 = inlined_call_operand.hbm [shape: f32[2,8,128], index: 3, kind: output, shape index: {}]
  %s4 = sld [smem:[#allocation0]]
  $region61: #{tpu_custom_call.1} parent=0
    _
  %s6 = ssub.s32 1, %s4
  %s7 = scalar_select 0, %s6, %s4
  $region1: #{tpu_custom_call.1} parent=0
    #allocation3 [shape = 'u8[32768]{0}', space=vmem, size = 0x8000, scoped, tag = 'input window, operand 0']
    #allocation4 [shape = 's32[2]{0}', space=sflag, size = 0x8, scoped, tag = 'scoped memory for tpu_custom_call.1']
    #allocation5 [shape = 's32[2]{0}', space=sflag, size = 0x8, scoped, tag = 'scoped memory for tpu_custom_call.1']
    #allocation6 [shape = 'u8[8192]{0}', space=vmem, size = 0x2000, scoped, tag = 'input window, operand 1']
    #allocation7 [shape = 's32[2]{0}', space=sflag, size = 0x8, scoped, tag = 'scoped memory for tpu_custom_call.1']
    #allocation8 [shape = 'u8[8192]{0}', space=vmem, size = 0x2000, scoped, tag = 'output window, operand 0']
    %8 = vsyncpa [#allocation4], 0
    %s9 = scalar_lea.sflag [#allocation4], 1
    %10 = vsyncpa %s9, 0
    %11 = vsyncpa [#allocation7], 0
    %s12 = scalar_lea.sflag [#allocation7], 1
    %13 = vsyncpa %s12, 0
    %14 = vsyncpa [#allocation5], 0
    %s15 = scalar_lea.sflag [#allocation5], 1
    %16 = vsyncpa %s15, 0
    loop: start=0, step=1, limit=4
    $region2: #{tpu_custom_call.1} parent=1 // loop_pre_header
      _
    $region3: #{tpu_custom_call.1} parent=1 // loop_header
      %s18 = sphi 0, %s22
      %p19 = scmp.ge.s32.totalorder %s18, 4
      %s25 = sphi 0, %s37
      %s26 = sphi 0, %s33
      %s27 = sphi 0, %s25
      %s28 = sphi 0, %s26
      %s29 = sphi 0, %s27
      %s30 = sphi 0, %s28
      %s42 = sphi 0, %s44
      %s45 = sphi 0, %s42
      %s46 = sphi 0, %s45
      %s62 = sphi 0, %s46
      %s70 = sphi 0, %s72
      %s73 = sphi 0, %s70
      %s74 = sphi 0, %s73
      %s90 = sphi 0, %s74
      %s94 = sphi 0, %s94
      %s96 = sphi 0, %s94
      %s97 = sphi 0, %s96
      %s111 = sphi 0, %s97
      %s117 = sphi 0, %s119
      %s120 = sphi 0, %s117
      %s121 = sphi 0, %s120
      %s137 = sphi 0, %s121
    $region4: #{tpu_custom_call.1} parent=1 // loop_header_branch
      %21 = sbr.rel (%p19) target = $region8
    $region5: #{tpu_custom_call.1} parent=1 // loop_body
      %s23 = ssub.s32 %s18, 1
      %s24 = ssub.s32 %s18, 2
      %s31 = sadd.s32 1, %s26
      %p32 = scmp.ge.s32.totalorder %s31, 1
      %s33 = scalar_select %p32, 0, %s31
      %s34 = sadd.s32 1, %s25
      %s35 = scalar_select %p32, %s34, %s25
      %p36 = scmp.ge.s32.totalorder %s35, 2
      %s37 = scalar_select %p36, 0, %s35
      %s38 = ssub.s32 %s25, %s37
      %s39 = ssub.s32 %s26, %s33
      %s40 = sor.u32 %s38, %s39
      %p41 = scmp.eq.s32.totalorder %s40, 0
      %s43 = sadd.s32 %s42, 1
      %s44 = scalar_select %p41, %s42, %s43
      %p47 = pneg %p41
      %p48 = scmp.eq.s32.totalorder %s18, 1
      %p49 = por %p47, %p48
      %p50 = scmp.ne.s32.totalorder %s42, %s45
      %p51 = scmp.eq.s32.totalorder %s18, 0
      %p52 = por %p50, %p51
      %p53 = scmp.ne.s32.totalorder %s42, %s45
      %p54 = scmp.eq.s32.totalorder %s23, 1
      %p55 = por %p53, %p54
      %p56 = scmp.ne.s32.totalorder %s45, %s46
      %p57 = scmp.eq.s32.totalorder %s23, 0
      %p58 = por %p56, %p57
      %p59 = scmp.ne.s32.totalorder %s45, %s46
      %p60 = scmp.eq.s32.totalorder %s24, 1
      %p61 = por %p59, %p60
      %p63 = scmp.ne.s32.totalorder %s46, %s62
      %p64 = scmp.eq.s32.totalorder %s24, 0
      %p65 = por %p63, %p64
      %s66 = ssub.s32 %s25, %s37
      %s67 = ssub.s32 %s26, %s33
      %s68 = sor.u32 %s66, %s67
      %p69 = scmp.eq.s32.totalorder %s68, 0
      %s71 = sadd.s32 %s70, 1
      %s72 = scalar_select %p69, %s70, %s71
      %p75 = pneg %p69
      %p76 = scmp.eq.s32.totalorder %s18, 1
      %p77 = por %p75, %p76
      %p78 = scmp.ne.s32.totalorder %s70, %s73
      %p79 = scmp.eq.s32.totalorder %s18, 0
      %p80 = por %p78, %p79
      %p81 = scmp.ne.s32.totalorder %s70, %s73
      %p82 = scmp.eq.s32.totalorder %s23, 1
      %p83 = por %p81, %p82
      %p84 = scmp.ne.s32.totalorder %s73, %s74
      %p85 = scmp.eq.s32.totalorder %s23, 0
      %p86 = por %p84, %p85
      %p87 = scmp.ne.s32.totalorder %s73, %s74
      %p88 = scmp.eq.s32.totalorder %s24, 1
      %p89 = por %p87, %p88
      %p91 = scmp.ne.s32.totalorder %s74, %s90
      %p92 = scmp.eq.s32.totalorder %s24, 0
      %p93 = por %p91, %p92
      %s95 = sadd.s32 %s94, 1
      %p98 = scmp.eq.s32.totalorder %s18, 1
      %p99 = scmp.ne.s32.totalorder %s94, %s96
      %p100 = scmp.eq.s32.totalorder %s18, 0
      %p101 = por %p99, %p100
      %p102 = scmp.ne.s32.totalorder %s94, %s96
      %p103 = scmp.eq.s32.totalorder %s23, 1
      %p104 = por %p102, %p103
      %p105 = scmp.ne.s32.totalorder %s96, %s97
      %p106 = scmp.eq.s32.totalorder %s23, 0
      %p107 = por %p105, %p106
      %p108 = scmp.ne.s32.totalorder %s96, %s97
      %p109 = scmp.eq.s32.totalorder %s24, 1
      %p110 = por %p108, %p109
      %p112 = scmp.ne.s32.totalorder %s97, %s111
      %p113 = scmp.eq.s32.totalorder %s24, 0
      %p114 = por %p112, %p113
      %s115 = ssub.s32 %s25, %s37
      %p116 = scmp.eq.s32.totalorder %s115, 0
      %s118 = sadd.s32 %s117, 1
      %s119 = scalar_select %p116, %s117, %s118
      %p122 = pneg %p116
      %p123 = scmp.eq.s32.totalorder %s18, 1
      %p124 = por %p122, %p123
      %p125 = scmp.ne.s32.totalorder %s117, %s120
      %p126 = scmp.eq.s32.totalorder %s18, 0
      %p127 = por %p125, %p126
      %p128 = scmp.ne.s32.totalorder %s117, %s120
      %p129 = scmp.eq.s32.totalorder %s23, 1
      %p130 = por %p128, %p129
      %p131 = scmp.ne.s32.totalorder %s120, %s121
      %p132 = scmp.eq.s32.totalorder %s23, 0
      %p133 = por %p131, %p132
      %p134 = scmp.ne.s32.totalorder %s120, %s121
      %p135 = scmp.eq.s32.totalorder %s24, 1
      %p136 = por %p134, %p135
      %p138 = scmp.ne.s32.totalorder %s121, %s137
      %p139 = scmp.eq.s32.totalorder %s24, 0
      %p140 = por %p138, %p139
      %p141 = scmp.le.s32.totalorder 1, %s18
      %p142 = scmp.lt.s32.totalorder %s18, 3
      %p143 = pnand %p141, %p142
      %p144 = pneg %p143
      // Predicated region
      $region9: #{tpu_custom_call.1} parent=5 // pred_check
        _
      $region10: #{tpu_custom_call.1} parent=5 // pred_check_branch
        %146 = sbr.rel (%p143) target = $region12
      $region11: #{tpu_custom_call.1} parent=5 // pred_region
        %s147 = ssub.s32 %s18, 1
        // Predicated region
        $region13: #{tpu_custom_call.1} parent=11 // pred_check
          %p148 = pneg %p107
        $region14: #{tpu_custom_call.1} parent=11 // pred_check_branch
          %150 = sbr.rel (%p148) target = $region16
        $region15: #{tpu_custom_call.1} parent=11 // pred_region
          _
        $region16: #{tpu_custom_call.1} parent=11 // pred_fallthru
          _
      $region12: #{tpu_custom_call.1} parent=5 // pred_fallthru
        _
      %p151 = scmp.lt.s32.totalorder %s18, 2
      // Predicated region
      $region17: #{tpu_custom_call.1} parent=5 // pred_check
        %p152 = pneg %p151
      $region18: #{tpu_custom_call.1} parent=5 // pred_check_branch
        %154 = sbr.rel (%p152) target = $region20
      $region19: #{tpu_custom_call.1} parent=5 // pred_region
        // Predicated region
        $region21: #{tpu_custom_call.1} parent=19 // pred_check
          %p155 = pneg %p52
        $region22: #{tpu_custom_call.1} parent=19 // pred_check_branch
          %157 = sbr.rel (%p155) target = $region24
        $region23: #{tpu_custom_call.1} parent=19 // pred_region
          %s158 = sand.u32 %s42, 1
          %s159 = scalar_lea.sflag [#allocation4], %s158
          %s160 = sand.u32 %s42, 1
          %s161 = smul.addr %s160, 32
          %s162 = scalar_lea.vmem [#allocation3], %s161
          %s164 = ssub.s32 512, 512
          %165 = vsyncadd %s159, %s164
          %s166 = smul.addr %s25, 4
          %s167 = sadd.s32 %s26, %s166
          %s168 = smul.addr %s167, 128
          %s169 = scalar_lea.hbm %s0, %s168
          %s170 = sshll.u32 %s162, 4
          %s171 = int_to_ptr.vmem [resolvable:$true] %s170
          %176 = dma.hbm_to_vmem [thread:$0]  %s169, 512, %s171, %s159, 128, 128, 8
        $region24: #{tpu_custom_call.1} parent=19 // pred_fallthru
          _
        // Predicated region
        $region25: #{tpu_custom_call.1} parent=19 // pred_check
          %p177 = pneg %p80
        $region26: #{tpu_custom_call.1} parent=19 // pred_check_branch
          %179 = sbr.rel (%p177) target = $region28
        $region27: #{tpu_custom_call.1} parent=19 // pred_region
          %s180 = sand.u32 %s70, 1
          %s181 = scalar_lea.sflag [#allocation7], %s180
          %s182 = sand.u32 %s70, 1
          %s183 = smul.addr %s182, 8
          %s184 = scalar_lea.vmem [#allocation6], %s183
          %s186 = ssub.s32 128, 128
          %187 = vsyncadd %s181, %s186
          %s188 = sadd.s32 %s26, %s25
          %s189 = smul.addr %s188, 128
          %s190 = scalar_lea.hbm %s1, %s189
          %s192 = sshll.u32 %s184, 4
          %s193 = int_to_ptr.vmem [resolvable:$true] %s192
          %195 = dma.hbm_to_vmem [thread:$0]  %s190, 128, %s193, %s181
        $region28: #{tpu_custom_call.1} parent=19 // pred_fallthru
          _
      $region20: #{tpu_custom_call.1} parent=5 // pred_fallthru
        _
      %p196 = scmp.le.s32.totalorder 1, %s18
      %p197 = scmp.lt.s32.totalorder %s18, 3
      %p198 = pnand %p196, %p197
      %p199 = pneg %p198
      // Predicated region
      $region29: #{tpu_custom_call.1} parent=5 // pred_check
        _
      $region30: #{tpu_custom_call.1} parent=5 // pred_check_branch
        %201 = sbr.rel (%p198) target = $region32
      $region31: #{tpu_custom_call.1} parent=5 // pred_region
        %s202 = ssub.s32 %s18, 1
        %s203 = sand.u32 %s45, 1
        %s204 = scalar_lea.sflag [#allocation4], %s203
        %s205 = sand.u32 %s45, 1
        %s206 = smul.addr %s205, 32
        %s207 = scalar_lea.vmem [#allocation3], %s206
        // Predicated region
        $region33: #{tpu_custom_call.1} parent=31 // pred_check
          %p208 = pneg %p58
        $region34: #{tpu_custom_call.1} parent=31 // pred_check_branch
          %210 = sbr.rel (%p208) target = $region36
        $region35: #{tpu_custom_call.1} parent=31 // pred_region
          %211 = dma.done %s204, 512
        $region36: #{tpu_custom_call.1} parent=31 // pred_fallthru
          _
        %s212 = sand.u32 %s73, 1
        %s213 = scalar_lea.sflag [#allocation7], %s212
        %s214 = sand.u32 %s73, 1
        %s215 = smul.addr %s214, 8
        %s216 = scalar_lea.vmem [#allocation6], %s215
        // Predicated region
        $region37: #{tpu_custom_call.1} parent=31 // pred_check
          %p217 = pneg %p86
        $region38: #{tpu_custom_call.1} parent=31 // pred_check_branch
          %219 = sbr.rel (%p217) target = $region40
        $region39: #{tpu_custom_call.1} parent=31 // pred_region
          %220 = dma.done %s213, 128
        $region40: #{tpu_custom_call.1} parent=31 // pred_fallthru
          _
        %s221 = sand.u32 %s45, 1
        %s222 = scalar_lea.sflag [#allocation4], %s221
        %s223 = sand.u32 %s45, 1
        %s224 = smul.addr %s223, 32
        %s225 = scalar_lea.vmem [#allocation3], %s224
        %p226 = pneg %p58
        %p227 = pneg %p55
        %s228 = sand.u32 %s73, 1
        %s229 = scalar_lea.sflag [#allocation7], %s228
        %s230 = sand.u32 %s73, 1
        %s231 = smul.addr %s230, 8
        %s232 = scalar_lea.vmem [#allocation6], %s231
        %p233 = pneg %p86
        %p234 = pneg %p83
        %p235 = pneg %p107
        %p236 = pneg %p104
        %p237 = pneg %p133
        %p238 = pneg %p130
        %s239 = sand.u32 %s120, 1
        %s240 = scalar_lea.sflag [#allocation5], %s239
        %s241 = sand.u32 %s120, 1
        %s242 = smul.addr %s241, 8
        %s243 = scalar_lea.vmem [#allocation8], %s242
        %p244 = scmp.eq.s32.totalorder %s28, 0
        // Predicated region
        $region41: #{tpu_custom_call.1} parent=31 // pred_check
          %p245 = pneg %p244
        $region42: #{tpu_custom_call.1} parent=31 // pred_check_branch
          %247 = sbr.rel (%p245) target = $region44
        $region43: #{tpu_custom_call.1} parent=31 // pred_region
          %248 = vst [vmem:[#allocation2] sm:$0xff] 0.0
        $region44: #{tpu_custom_call.1} parent=31 // pred_fallthru
          _
        %v249 = vld [vmem:[%s207] sm:$0xff]
        %v250 = vld [vmem:[%s207 + $0x8] sm:$0xff]
        %v251 = vld [vmem:[%s207 + $0x10] sm:$0xff]
        %v252 = vld [vmem:[%s207 + $0x18] sm:$0xff]
        %v253 = vld [vmem:[%s216] sm:$0xff]
        %v254 = vmax.f32 %v249, %v250
        %v255 = vmax.f32 %v251, %v252
        %v256 = vmax.f32 %v254, %v255
        %v257 = vsub.f32 %v249, %v256
        %v258 = vsub.f32 %v250, %v256
        %v259 = vsub.f32 %v251, %v256
        %v260 = vsub.f32 %v252, %v256
        %v261 = vmul.f32 %v257, 1.442695
        %v262 = vpow.pop %v261
        %v263 = vmul.f32 %v258, 1.442695
        %v264 = vpow.pop %v263
        %v265 = vmul.f32 %v259, 1.442695
        %v266 = vpow.pop %v265
        %v267 = vmul.f32 %v260, 1.442695
        %v268 = vpow.pop %v267
        %v269 = vadd.f32 %v262, %v264
        %v270 = vadd.f32 %v269, %v266
        %v271 = vadd.f32 %v270, %v268
        %vm272 = vcmp.eq.s32.totalorder %v253, 0
        %vm273 = vcmp.eq.s32.totalorder %v253, 1
        %vm274 = vcmp.eq.s32.totalorder %v253, 2
        %vm275 = vcmp.eq.s32.totalorder %v253, 3
        %v276 = vsel %vm272, %v249, 0.0
        %v277 = vsel %vm273, %v250, 0.0
        %v278 = vsel %vm274, %v251, 0.0
        %v279 = vsel %vm275, %v252, 0.0
        %v280 = vadd.f32 %v276, %v277
        %v281 = vadd.f32 %v280, %v278
        %v282 = vadd.f32 %v281, %v279
        %v283 = vsel %vm272, %v262, 0.0
        %v284 = vsel %vm273, %v264, 0.0
        %v285 = vsel %vm274, %v266, 0.0
        %v286 = vsel %vm275, %v268, 0.0
        %v287 = vadd.f32 %v283, %v284
        %v288 = vadd.f32 %v287, %v285
        %v289 = vadd.f32 %v288, %v286
        %v290 = vsub.f32 %v282, %v256
        %v291 = vlog2.pop %v271
        %v292 = vmul.f32 %v291, 0.6931472
        %v293 = vsub.f32 %v290, %v292
        %v294 = vrcp.pop %v271
        %v295 = vmul.f32 %v289, %v294
        %v296 = vsub.f32 1.0, %v295
        %v297 = vmul.f32 %v296, %v296
        %v298 = vld [vmem:[%s2] sm:$0x1]
        %v299 = vld [vmem:[%s2 + $0x1] sm:$0x1]
        %v300 = vld [vmem:[%s2 + $0x2] sm:$0x1]
        %v301 = vld [vmem:[%s2 + $0x3] sm:$0x1]
        %v306 = vlaneseq
        %v307 = vshrl.u32 %v306, 7
        %v308 = vsub.s32 0, %v307
        %v309 = vrot.slane %v298, %v308
        %v310 = vlaneseq
        %v311 = vshrl.u32 %v310, 7
        %v312 = vsub.s32 0, %v311
        %v313 = vrot.slane %v299, %v312
        %v314 = vlaneseq
        %v315 = vshrl.u32 %v314, 7
        %v316 = vsub.s32 0, %v315
        %v317 = vrot.slane %v300, %v316
        %v318 = vlaneseq
        %v319 = vshrl.u32 %v318, 7
        %v320 = vsub.s32 0, %v319
        %v321 = vrot.slane %v301, %v320
        %322 = vset.pattern.permute.xlu0 0
        %323 = vperm.xlu0 %322, %v309
        %v324 = vpop.permute.xlu0 %323
        %326 = vset.pattern.permute.xlu0 0
        %327 = vperm.xlu0 %326, %v313
        %v328 = vpop.permute.xlu0 %327
        %330 = vset.pattern.permute.xlu0 0
        %331 = vperm.xlu0 %330, %v317
        %v332 = vpop.permute.xlu0 %331
        %334 = vset.pattern.permute.xlu0 0
        %335 = vperm.xlu0 %334, %v321
        %v336 = vpop.permute.xlu0 %335
        %v338 = vsel %vm272, %v324, 0.0
        %v339 = vsel %vm273, %v328, 0.0
        %v340 = vsel %vm274, %v332, 0.0
        %v341 = vsel %vm275, %v336, 0.0
        %v342 = vadd.f32 %v338, %v339
        %v343 = vadd.f32 %v342, %v340
        %v344 = vadd.f32 %v343, %v341
        %v345 = vmul.f32 %v293, %v344
        %v346 = vmul.f32 %v297, -1.0
        %v347 = vmul.f32 %v346, %v345
        %s348 = smul.u32 %s28, 8
        %v349 = vlaneseq
        %v350 = vshrl.u32 %v349, 7
        %v351 = vstv %s348
        %v352 = vadd.s32 %v351, %v350
        %v353 = vlaneseq
        %v354 = vand.u32 %v353, 127
        %v355 = vmul.u32 %v352, 128
        %v356 = vadd.s32 %v355, %v354
        %vm357 = vcmp.lt.s32.totalorder %v356, 256
        %v358 = vld [vmem:[#allocation2] sm:$0xff]
        %v359 = vsel %vm357, %v347, 0.0
        %v360 = vadd.f32 %v358, %v359
        %361 = vst [vmem:[#allocation2] sm:$0xff] %v360
        // Predicated region
        $region45: #{tpu_custom_call.1} parent=31 // pred_check
          %p362 = pneg %p244
        $region46: #{tpu_custom_call.1} parent=31 // pred_check_branch
          %364 = sbr.rel (%p362) target = $region48
        $region47: #{tpu_custom_call.1} parent=31 // pred_region
          %v365 = vld [vmem:[#allocation2] sm:$0xff]
          %v366 = vadd.f32 %v365, 0.0
          %367 = vst [vmem:[%s243] sm:$0xff] %v366
        $region48: #{tpu_custom_call.1} parent=31 // pred_fallthru
          _
        %s368 = sand.u32 %s120, 1
        %s369 = scalar_lea.sflag [#allocation5], %s368
        %s370 = sand.u32 %s120, 1
        %s371 = smul.addr %s370, 8
        %s372 = scalar_lea.vmem [#allocation8], %s371
        // Predicated region
        $region49: #{tpu_custom_call.1} parent=31 // pred_check
          %p373 = pneg %p130
        $region50: #{tpu_custom_call.1} parent=31 // pred_check_branch
          %375 = sbr.rel (%p373) target = $region52
        $region51: #{tpu_custom_call.1} parent=31 // pred_region
          %s377 = ssub.s32 128, 128
          %378 = vsyncadd %s369, %s377
          %s379 = smul.addr %s27, 128
          %s380 = scalar_lea.hbm %s3, %s379
          %s382 = sshll.u32 %s372, 4
          %s383 = int_to_ptr.vmem [resolvable:$true] %s382
          %385 = dma.vmem_to_hbm [thread:$0]  %s383, 128, %s380, %s369
        $region52: #{tpu_custom_call.1} parent=31 // pred_fallthru
          _
      $region32: #{tpu_custom_call.1} parent=5 // pred_fallthru
        _
      %p386 = scmp.le.s32.totalorder 2, %s18
      // Predicated region
      $region53: #{tpu_custom_call.1} parent=5 // pred_check
        %p387 = pneg %p386
      $region54: #{tpu_custom_call.1} parent=5 // pred_check_branch
        %389 = sbr.rel (%p387) target = $region56
      $region55: #{tpu_custom_call.1} parent=5 // pred_region
        %s390 = ssub.s32 %s18, 2
        // Predicated region
        $region57: #{tpu_custom_call.1} parent=55 // pred_check
          %p391 = pneg %p136
        $region58: #{tpu_custom_call.1} parent=55 // pred_check_branch
          %393 = sbr.rel (%p391) target = $region60
        $region59: #{tpu_custom_call.1} parent=55 // pred_region
          %s394 = sand.u32 %s121, 1
          %s395 = scalar_lea.sflag [#allocation5], %s394
          %s396 = sand.u32 %s121, 1
          %s397 = smul.addr %s396, 8
          %s398 = scalar_lea.vmem [#allocation8], %s397
          %399 = dma.done %s395, 128
        $region60: #{tpu_custom_call.1} parent=55 // pred_fallthru
          _
      $region56: #{tpu_custom_call.1} parent=5 // pred_fallthru
        _
    $region6: #{tpu_custom_call.1} parent=1 // loop_footer
      %s22 = sadd.s32 1, %s18
    $region7: #{tpu_custom_call.1} parent=1 // loop_footer_branch
      %17 = sbr.rel target = $region3
    $region8: #{tpu_custom_call.1} parent=1 // loop_exit
      _
    %400 = vsyncpa [#allocation4], 1
    %s401 = scalar_lea.sflag [#allocation4], 1
    %402 = vsyncpa %s401, 1
    %403 = vsyncpa [#allocation7], 1
    %s404 = scalar_lea.sflag [#allocation7], 1
    %405 = vsyncpa %s404, 1
    %406 = vsyncpa [#allocation5], 1
    %s407 = scalar_lea.sflag [#allocation5], 1
    %408 = vsyncpa %s407, 1

</llo_original>
